<compile_context>
chip_gen: v7x
topology: tpu7x:2x2x1
jax: 0.10.0
libtpu: 0.0.40
codegen_flags: <defaults>
</compile_context>

<pallas_src>
import functools

import jax
import jax.numpy as jnp
from jax import lax
from jax.experimental import pallas as pl
from jax.experimental.pallas import tpu as pltpu

LANE = 128


def _round_up(v, m):
    return ((v + m - 1) // m) * m


def _vmem_budget_bytes():
    """Per-generation scoped-VMEM budget (v7x has half the VMEM of v5e/v6e)."""
    try:
        phys = pltpu.get_tpu_info().vmem_capacity_bytes
    except Exception:
        phys = 128 << 20
    return max(8 << 20, min(phys // 2, 48 << 20))


def _default_compute_dtype():
    """bf16 MXU operands on v6e/v7x (native bf16 VPU/MXU), f32 elsewhere (v5e)."""
    try:
        kind = jax.devices()[0].device_kind.lower()
        if ("v6" in kind) or ("v7" in kind):
            return jnp.bfloat16
    except Exception:
        pass
    return jnp.float32


def _pick_stage2_tile(D, cap):
    """Stage-2 D tile. Prefer a multiple-of-128 tile that divides D exactly so the
    flat (J, O*D + O) output is produced natively with zero wrapper epilogue."""
    cap = max(LANE, (cap // LANE) * LANE)
    if D % LANE == 0:
        for k in range(min(cap, D) // LANE, 0, -1):
            td = LANE * k
            if D % td == 0 and (td == D or td >= min(D, 1024)):
                return td, D                     # exact: Dp == D
    td = min(cap, _round_up(D, LANE))
    return td, _round_up(D, td)                  # padded fallback


def _residual_kernel(x_ref, w_ref, ymbT_ref, jac2_ref, L_ref, gb_ref, acc_ref):
    """Stage 1: D-tiled reduction producing the mixing tensor and bias grads.

    x_ref    : (B, td1)      input tile
    w_ref    : (O, td1)      weight tile
    ymbT_ref : (O, B)        (y - b)^T  (bias folded into targets by the wrapper)
    jac2_ref : (J, B)        2 * jac    (MSE factor folded in by the wrapper)
    L_ref    : (O, J, B) out mixing tensor L[o,j,b] = 2*jac[j,b]*r[b,o]
    gb_ref   : (J, Tpad) out jac-mixed bias grads, lane-padded for stage 2's tail
    acc_ref  : (O, B)        VMEM scratch: yhat^T accumulator (never hits HBM)
    """
    t = pl.program_id(0)

    @pl.when(t == 0)
    def _():
        acc_ref[...] = jnp.zeros_like(acc_ref)

    # accumulate yhat^T tile-by-tile over D:  W_tile @ x_tile^T -> (O, B)
    acc_ref[...] += lax.dot_general(
        w_ref[...], x_ref[...], (((1,), (1,)), ((), ())),
        preferred_element_type=jnp.float32)

    @pl.when(t == pl.num_programs(0) - 1)
    def _():
        O = ymbT_ref.shape[0]
        rT = acc_ref[...] - ymbT_ref[...]                    # (O, B) residual^T
        gb = lax.dot_general(                                # (J, O)
            jac2_ref[...], rT, (((1,), (1,)), ((), ())),
            preferred_element_type=jnp.float32)
        gb_ref[...] = jnp.zeros_like(gb_ref)
        gb_ref[:, :O] = gb
        # mixing tensor L[o, j, b] = (2*jac)[j, b] * rT[o, b]
        L_ref[...] = (jac2_ref[...][None, :, :] * rT[:, None, :]).astype(L_ref.dtype)


def _flat_grad_kernel(L_ref, gb_ref, x_ref, out_ref, *, n_gw):
    """Stage 2: writes the flat bdW = [weight grads | bias grads] natively.

    Grid step t < n_gw : o = t % O, dt = t // O; one (J,B)x(B,td2) MXU matmul
                         into flat columns [o*Dp + dt*td2, +td2).
    Grid step t >= n_gw: copies the (pre-padded) bias-grad tail block; the part
                         of the block past the array end is dropped by Pallas.
    """
    t = pl.program_id(0)
    O = L_ref.shape[0]

    @pl.when(t < n_gw)
    def _():
        o = t % O
        out_ref[...] = lax.dot_general(
            L_ref[o], x_ref[...], (((1,), (0,)), ((), ())),
            preferred_element_type=jnp.float32).astype(out_ref.dtype)

    @pl.when(t >= n_gw)
    def _():
        out_ref[...] = gb_ref[...].astype(out_ref.dtype)


def gradient_extractor_forward(params, x, y, jac=None, single_grad=False,
                               flat_cat=True, compute_dtype=None,
                               out_dtype=jnp.float32,
                               stage2_tile_cap=16384, stage1_tile_cap=32768):
    """JAX/Pallas analogue of GradientExtractor.forward for a Linear + MSE model.

    Returns (bdW, Wflat) with bdW: (J, O*D + O), Wflat: (O*D + O,) when flat_cat,
    otherwise ((gw (J,O,D), gb (J,O)), (W, b)).
    """
    W, b = params
    B = x.shape[0]
    x2d = x.reshape(B, -1)                          # NCHW -> (B, D) glue
    O, D = W.shape
    assert x2d.shape[1] == D

    if single_grad:
        # grad of batch_public_loss.sum(), unsqueezed to a leading dim of 1
        jac = jnp.ones((1, B), jnp.float32)
    assert jac is not None, "pointwise grad requires jac"
    J = jac.shape[0]
    jac2 = (2.0 * jac).astype(jnp.float32)          # fold d(MSE)/d(yhat) factor of 2

    if compute_dtype is None:
        compute_dtype = _default_compute_dtype()
    cbytes = jnp.dtype(compute_dtype).itemsize
    obytes = jnp.dtype(out_dtype).itemsize

    # --- per-stage, per-generation D tiles --------------------------------------
    budget = _vmem_budget_bytes()
    cap2 = max(LANE, min(int(stage2_tile_cap),
                         (budget // 2) // max(1, 2 * (B * cbytes + J * obytes))))
    tile_d2, Dp = _pick_stage2_tile(D, cap2)
    n_d = Dp // tile_d2
    exact = (Dp == D)

    # stage-1 tile: an integer multiple of the stage-2 tile (shares the padding)
    cap1 = max(tile_d2, min(int(stage1_tile_cap),
                            (budget // 2) // max(1, 2 * (B + O) * cbytes)))
    m = 1
    for k in range(n_d, 0, -1):
        if n_d % k == 0 and k * tile_d2 <= cap1:
            m = k
            break
    tile_d1 = tile_d2 * m
    n_d1 = n_d // m

    # bias-grad tail blocks of the flat layout
    n_tail = -(-O // tile_d2)
    Tpad = n_tail * tile_d2

    # --- operands (single padding pass, shared by both stages) ------------------
    if Dp != D:
        x2d = jnp.pad(x2d, ((0, 0), (0, Dp - D)))
        Wp = jnp.pad(W, ((0, 0), (0, Dp - D)))
    else:
        Wp = W
    xc = x2d.astype(compute_dtype)
    Wc = Wp.astype(compute_dtype)
    ymbT = (y.T - b[:, None]).astype(jnp.float32)    # (O, B): bias folded into y

    vmem_limit = int(budget)

    # --- stage 1: residual reduction -> mixing tensor L + padded bias grads -----
    L, gb_pad = pl.pallas_call(
        _residual_kernel,
        out_shape=(jax.ShapeDtypeStruct((O, J, B), compute_dtype),
                   jax.ShapeDtypeStruct((J, Tpad), jnp.float32)),
        grid=(n_d1,),
        in_specs=[
            pl.BlockSpec((B, tile_d1), lambda t: (0, t)),    # x tile
            pl.BlockSpec((O, tile_d1), lambda t: (0, t)),    # W tile
            pl.BlockSpec((O, B), lambda t: (0, 0)),          # (y - b)^T (resident)
            pl.BlockSpec((J, B), lambda t: (0, 0)),          # 2*jac     (resident)
        ],
        out_specs=(pl.BlockSpec((O, J, B), lambda t: (0, 0, 0)),
                   pl.BlockSpec((J, Tpad), lambda t: (0, 0))),
        scratch_shapes=[pltpu.VMEM((O, B), jnp.float32)],
        compiler_params=pltpu.CompilerParams(
            dimension_semantics=("arbitrary",),              # reduction: keep serial
            vmem_limit_bytes=vmem_limit),
    )(xc, Wc, ymbT, jac2)

    # --- stage 2: flat bdW produced natively (no wrapper concat / depad) --------
    P = O * Dp + O                                   # flat width: [W grads | b grads]
    n_gw = O * n_d
    n_steps = n_gw + n_tail

    def x_map(t):                                    # x D-tile (o varies fastest ->
        return (0, jnp.minimum(t // O, n_d - 1))     #  each tile DMA'd once)

    def gb_map(t):
        return (0, jnp.maximum(t - n_gw, 0))

    def out_map(t):                                  # flat column block
        return (0, jnp.where(t >= n_gw, t, (t % O) * n_d + t // O))

    bdW_p = pl.pallas_call(
        functools.partial(_flat_grad_kernel, n_gw=n_gw),
        out_shape=jax.ShapeDtypeStruct((J, P), out_dtype),
        grid=(n_steps,),
        in_specs=[
            pl.BlockSpec((O, J, B), lambda t: (0, 0, 0)),    # L       (resident)
            pl.BlockSpec((J, tile_d2), gb_map),              # bias-grad tail
            pl.BlockSpec((B, tile_d2), x_map),               # x tile
        ],
        out_specs=pl.BlockSpec((J, tile_d2), out_map),
        compiler_params=pltpu.CompilerParams(
            dimension_semantics=("parallel",),               # megacore on v7x
            vmem_limit_bytes=vmem_limit),
    )(L, gb_pad, xc)

    if exact:
        bdW = bdW_p                                  # already (J, O*D + O); zero epilogue
    else:
        # TODO(synk): rare path (D not a multiple of 128): one extra re-stream to
        # strip interior padding; pre-pad D upstream to avoid it entirely.
        parts = [bdW_p[:, o * Dp:o * Dp + D] for o in range(O)]
        parts.append(bdW_p[:, O * Dp:O * Dp + O])
        bdW = jnp.concatenate(parts, axis=1)

    if flat_cat:
        Wflat = jnp.concatenate([W.reshape(-1), b.reshape(-1)])      # (O*D + O,)
        return bdW, Wflat
    gw = bdW[:, :O * D].reshape(J, O, D)
    gbias = bdW[:, O * D:]
    # TODO(synk): par_sel hook (arbitrary parameter-selection callable) not modeled.
    return (gw, gbias), (W, b)


def _reference(params, x, y, jac):
    """Pure-JAX reference: vmap(grad) per-sample gradients, mixed by jac."""
    W, b = params
    B = x.shape[0]
    x2d = x.reshape(B, -1).astype(jnp.float32)

    def loss_fn(p, xi, yi):
        Wp, bp = p
        yhat = xi @ Wp.T + bp
        return jnp.sum((yhat - yi) ** 2)

    gW, gb = jax.vmap(jax.grad(loss_fn), in_axes=(None, 0, 0))(
        (W, b), x2d, y.astype(jnp.float32))
    G = jnp.concatenate([gW.reshape(B, -1), gb], axis=1)     # (B, P)
    bdW = jac @ G
    Wflat = jnp.concatenate([W.reshape(-1), b.reshape(-1)])
    return bdW, Wflat


if __name__ == "__main__":
    key = jax.random.PRNGKey(0)
    kx, ky, kw, kb, kx2, kw2, ky2 = jax.random.split(key, 7)

    # small image-like batch (NCHW) and a linear "public model"
    B, C, H, Wd = 8, 4, 16, 16        # x: (8, 4, 16, 16)
    D = C * H * Wd                    # 1024 in-features
    O = 8                             # output_dim = 8*1024 + 8 = 8200

    x = jax.random.normal(kx, (B, C, H, Wd), dtype=jnp.float32)
    y = jax.random.normal(ky, (B, O), dtype=jnp.float32)
    W = 0.1 * jax.random.normal(kw, (O, D), dtype=jnp.float32)
    b = 0.1 * jax.random.normal(kb, (O,), dtype=jnp.float32)

    jac = jnp.eye(B, dtype=jnp.float32)   # identity grad_outputs -> per-sample grads

    bdW, Wflat = gradient_extractor_forward((W, b), x, y, jac=jac,
                                            compute_dtype=jnp.float32)
    jax.block_until_ready(bdW)
    jax.block_until_ready(Wflat)

    bdW_ref, Wflat_ref = _reference((W, b), x, y, jac)
    assert bdW.shape == (B, O * D + O)
    assert Wflat.shape == (O * D + O,)
    ref_scale = float(jnp.max(jnp.abs(bdW_ref)))
    assert float(jnp.max(jnp.abs(bdW - bdW_ref))) < 1e-3 * ref_scale + 1e-3
    assert float(jnp.max(jnp.abs(Wflat - Wflat_ref))) < 1e-6

    # single_grad=True path (summed gradient, leading dim 1)
    bdW1, _ = gradient_extractor_forward((W, b), x, y, single_grad=True,
                                         compute_dtype=jnp.float32)
    jax.block_until_ready(bdW1)
    assert bdW1.shape == (1, O * D + O)
    sum_ref = bdW_ref.sum(axis=0)
    sum_scale = float(jnp.max(jnp.abs(sum_ref)))
    assert float(jnp.max(jnp.abs(bdW1[0] - sum_ref))) < 1e-3 * sum_scale + 1e-3

    # bf16 MXU operands (v6e/v7x default); f32 accumulation, loose tolerance
    bdW_bf16, _ = gradient_extractor_forward((W, b), x, y, jac=jac,
                                             compute_dtype=jnp.bfloat16)
    jax.block_until_ready(bdW_bf16)
    assert float(jnp.max(jnp.abs(bdW_bf16.astype(jnp.float32) - bdW_ref))) \
        < 0.1 * ref_scale

    # D not a multiple of 128 -> padded fallback path exercises the depad epilogue
    D2 = 4 * 10 * 10
    x2 = jax.random.normal(kx2, (B, 4, 10, 10), dtype=jnp.float32)
    W2 = 0.1 * jax.random.normal(kw2, (O, D2), dtype=jnp.float32)
    y2 = jax.random.normal(ky2, (B, O), dtype=jnp.float32)
    bdW2, _ = gradient_extractor_forward((W2, b), x2, y2, jac=jac,
                                         compute_dtype=jnp.float32)
    jax.block_until_ready(bdW2)
    bdW2_ref, _ = _reference((W2, b), x2, y2, jac)
    s2 = float(jnp.max(jnp.abs(bdW2_ref)))
    assert bdW2.shape == (B, O * D2 + O)
    assert float(jnp.max(jnp.abs(bdW2 - bdW2_ref))) < 1e-3 * s2 + 1e-3

    print("KERNEL_OK")
</pallas_src>

<mosaic_0001>
module attributes {stable_mosaic.version = 11 : i64} {
  func.func @_residual_kernel(%arg0: i32, %arg1: memref<8x1024xf32, #tpu.memory_space<vmem>>, %arg2: memref<8x1024xf32, #tpu.memory_space<vmem>>, %arg3: memref<8x8xf32, #tpu.memory_space<vmem>>, %arg4: memref<8x8xf32, #tpu.memory_space<vmem>>, %arg5: memref<8x8x8xf32, #tpu.memory_space<vmem>>, %arg6: memref<8x1024xf32, #tpu.memory_space<vmem>>, %arg7: memref<8x8xf32, #tpu.memory_space<vmem>>) attributes {dimension_semantics = [#tpu.dimension_semantics<arbitrary>], iteration_bounds = array<i64: 1>, scalar_prefetch = 0 : i64, scratch_operands = 1 : i64, tpu.core_type = #tpu.core_type<tc>, window_params = [{transform_indices = @transform_0, window_bounds = array<i64: 8, 1024>}, {transform_indices = @transform_1, window_bounds = array<i64: 8, 1024>}, {pipeline_mode = #tpu.pipeline_mode<synchronous>, transform_indices = @transform_2, window_bounds = array<i64: 8, 8>}, {pipeline_mode = #tpu.pipeline_mode<synchronous>, transform_indices = @transform_3, window_bounds = array<i64: 8, 8>}, {pipeline_mode = #tpu.pipeline_mode<synchronous>, transform_indices = @transform_4, window_bounds = array<i64: 8, 8, 8>}, {pipeline_mode = #tpu.pipeline_mode<synchronous>, transform_indices = @transform_5, window_bounds = array<i64: 8, 1024>}]} {
    %c0_i32 = arith.constant 0 : i32
    %0 = arith.cmpi eq, %arg0, %c0_i32 : i32
    %1 = arith.extui %0 : i1 to i32
    %c0_i32_0 = arith.constant 0 : i32
    %2 = arith.cmpi ne, %1, %c0_i32_0 : i32
    scf.if %2 {
      %cst_10 = arith.constant 0.000000e+00 : f32
      %12 = vector.broadcast %cst_10 : f32 to vector<8x8xf32>
      %c0_11 = arith.constant 0 : index
      %c0_12 = arith.constant 0 : index
      %13 = vector.load %arg7[%c0_11, %c0_12] : memref<8x8xf32, #tpu.memory_space<vmem>>, vector<8x8xf32>
      tpu.vector_store %arg7[%c0_11, %c0_12], %12 {strides = array<i32>} : memref<8x8xf32, #tpu.memory_space<vmem>>, vector<8x8xf32>,
    } else {
    }
    %c0 = arith.constant 0 : index
    %c0_1 = arith.constant 0 : index
    %3 = vector.load %arg7[%c0, %c0_1] : memref<8x8xf32, #tpu.memory_space<vmem>>, vector<8x8xf32>
    %c0_2 = arith.constant 0 : index
    %c0_3 = arith.constant 0 : index
    %4 = vector.load %arg2[%c0_2, %c0_3] : memref<8x1024xf32, #tpu.memory_space<vmem>>, vector<8x1024xf32>
    %c0_4 = arith.constant 0 : index
    %c0_5 = arith.constant 0 : index
    %5 = vector.load %arg1[%c0_4, %c0_5] : memref<8x1024xf32, #tpu.memory_space<vmem>>, vector<8x1024xf32>
    %cst = arith.constant dense<0.000000e+00> : vector<8x8xf32>
    %6 = tpu.matmul %4, %5, %cst {dimension_numbers = #tpu.dot_dimension_numbers<[1], [1], [0], [0], [0, 0, 1, 0], [], []>} : vector<8x1024xf32>, vector<8x1024xf32>, vector<8x8xf32> -> vector<8x8xf32>
    %7 = arith.addf %3, %6 : vector<8x8xf32>
    %c0_6 = arith.constant 0 : index
    %c0_7 = arith.constant 0 : index
    %8 = vector.load %arg7[%c0_6, %c0_7] : memref<8x8xf32, #tpu.memory_space<vmem>>, vector<8x8xf32>
    tpu.vector_store %arg7[%c0_6, %c0_7], %7 {strides = array<i32>} : memref<8x8xf32, #tpu.memory_space<vmem>>, vector<8x8xf32>,
    %c0_i32_8 = arith.constant 0 : i32
    %9 = arith.cmpi eq, %arg0, %c0_i32_8 : i32
    %10 = arith.extui %9 : i1 to i32
    %c0_i32_9 = arith.constant 0 : i32
    %11 = arith.cmpi ne, %10, %c0_i32_9 : i32
    scf.if %11 {
      %c0_10 = arith.constant 0 : index
      %c0_11 = arith.constant 0 : index
      %12 = vector.load %arg7[%c0_10, %c0_11] : memref<8x8xf32, #tpu.memory_space<vmem>>, vector<8x8xf32>
      %c0_12 = arith.constant 0 : index
      %c0_13 = arith.constant 0 : index
      %13 = vector.load %arg3[%c0_12, %c0_13] : memref<8x8xf32, #tpu.memory_space<vmem>>, vector<8x8xf32>
      %14 = arith.subf %12, %13 : vector<8x8xf32>
      %c0_14 = arith.constant 0 : index
      %c0_15 = arith.constant 0 : index
      %15 = vector.load %arg4[%c0_14, %c0_15] : memref<8x8xf32, #tpu.memory_space<vmem>>, vector<8x8xf32>
      %cst_16 = arith.constant dense<0.000000e+00> : vector<8x8xf32>
      %16 = tpu.matmul %15, %14, %cst_16 {dimension_numbers = #tpu.dot_dimension_numbers<[1], [1], [0], [0], [0, 0, 1, 0], [], []>} : vector<8x8xf32>, vector<8x8xf32>, vector<8x8xf32> -> vector<8x8xf32>
      %cst_17 = arith.constant 0.000000e+00 : f32
      %17 = vector.broadcast %cst_17 : f32 to vector<8x1024xf32>
      %c0_18 = arith.constant 0 : index
      %c0_19 = arith.constant 0 : index
      %18 = vector.load %arg6[%c0_18, %c0_19] : memref<8x1024xf32, #tpu.memory_space<vmem>>, vector<8x1024xf32>
      tpu.vector_store %arg6[%c0_18, %c0_19], %17 {strides = array<i32>} : memref<8x1024xf32, #tpu.memory_space<vmem>>, vector<8x1024xf32>,
      %c0_20 = arith.constant 0 : index
      %c0_21 = arith.constant 0 : index
      %19 = vector.load %arg6[%c0_20, %c0_21] : memref<8x1024xf32, #tpu.memory_space<vmem>>, vector<8x8xf32>
      tpu.vector_store %arg6[%c0_20, %c0_21], %16 {strides = array<i32>} : memref<8x1024xf32, #tpu.memory_space<vmem>>, vector<8x8xf32>,
      %c0_22 = arith.constant 0 : index
      %c0_23 = arith.constant 0 : index
      %20 = vector.load %arg4[%c0_22, %c0_23] : memref<8x8xf32, #tpu.memory_space<vmem>>, vector<8x8xf32>
      %21 = vector.shape_cast %20 : vector<8x8xf32> to vector<1x8x8xf32>
      %22 = vector.shape_cast %14 : vector<8x8xf32> to vector<8x1x8xf32>
      %23 = vector.broadcast %21 : vector<1x8x8xf32> to vector<8x8x8xf32>
      %24 = vector.broadcast %22 : vector<8x1x8xf32> to vector<8x8x8xf32>
      %25 = arith.mulf %23, %24 : vector<8x8x8xf32>
      %c0_24 = arith.constant 0 : index
      %c0_25 = arith.constant 0 : index
      %c0_26 = arith.constant 0 : index
      %26 = vector.load %arg5[%c0_24, %c0_25, %c0_26] : memref<8x8x8xf32, #tpu.memory_space<vmem>>, vector<8x8x8xf32>
      tpu.vector_store %arg5[%c0_24, %c0_25, %c0_26], %25 {strides = array<i32>} : memref<8x8x8xf32, #tpu.memory_space<vmem>>, vector<8x8x8xf32>,
    } else {
    }
    return
  }
  func.func @transform_0(%arg0: i32) -> (i32, i32) {
    %c0_i32 = arith.constant 0 : i32
    %c0_i32_0 = arith.constant 0 : i32
    return %c0_i32, %arg0 : i32, i32
  }
  func.func @transform_1(%arg0: i32) -> (i32, i32) {
    %c0_i32 = arith.constant 0 : i32
    %c0_i32_0 = arith.constant 0 : i32
    return %c0_i32, %arg0 : i32, i32
  }
  func.func @transform_2(%arg0: i32) -> (i32, i32) {
    %c0_i32 = arith.constant 0 : i32
    %c0_i32_0 = arith.constant 0 : i32
    %c0_i32_1 = arith.constant 0 : i32
    return %c0_i32, %c0_i32_0 : i32, i32
  }
  func.func @transform_3(%arg0: i32) -> (i32, i32) {
    %c0_i32 = arith.constant 0 : i32
    %c0_i32_0 = arith.constant 0 : i32
    %c0_i32_1 = arith.constant 0 : i32
    return %c0_i32, %c0_i32_0 : i32, i32
  }
  func.func @transform_4(%arg0: i32) -> (i32, i32, i32) {
    %c0_i32 = arith.constant 0 : i32
    %c0_i32_0 = arith.constant 0 : i32
    %c0_i32_1 = arith.constant 0 : i32
    %c0_i32_2 = arith.constant 0 : i32
    return %c0_i32, %c0_i32_0, %c0_i32_1 : i32, i32, i32
  }
  func.func @transform_5(%arg0: i32) -> (i32, i32) {
    %c0_i32 = arith.constant 0 : i32
    %c0_i32_0 = arith.constant 0 : i32
    %c0_i32_1 = arith.constant 0 : i32
    return %c0_i32, %c0_i32_0 : i32, i32
  }
}

</mosaic_0001>

<llo_original>
// kernel: tpu_custom_call.1
$region0: #{tpu_custom_call.1}
  #allocation0 [shape = 'u32[]', space=smem, size = 0x4, offset = 0x4, fixed_abs, tag = 'smem constant byte address 0x4 - core index']
  #allocation1 [shape = 'u32[144,128]{1,0:T(1,128)}', space=vmem, size = 0x12000, scoped, tag = 'internal scratch']
  #allocation2 [shape = 'f32[8,8]{1,0:T(8,128)}', space=vmem, size = 0x1000, scoped, tag = 'scratch operand']
  %s0 = inlined_call_operand.hbm [shape: f32[8,1024], index: 0, kind: input, shape index: {}]
  %s1 = inlined_call_operand.hbm [shape: f32[8,1024], index: 1, kind: input, shape index: {}]
  %s2 = inlined_call_operand.hbm [shape: f32[8,8], index: 2, kind: input, shape index: {}]
  %s3 = inlined_call_operand.vmem [shape: f32[8,8], index: 3, kind: input, shape index: {}]
  %s4 = inlined_call_operand.hbm [shape: f32[8,8,8], index: 4, kind: output, shape index: {0}]
  %s5 = inlined_call_operand.hbm [shape: f32[8,1024], index: 5, kind: output, shape index: {1}]
  %6 = xla_tuple %s4, %s5
  %s7 = sld [smem:[#allocation0]]
  $region54: #{tpu_custom_call.1} parent=0
    _
  %s9 = ssub.s32 1, %s7
  %s10 = scalar_select 0, %s9, %s7
  $region1: #{tpu_custom_call.1} parent=0
    #allocation3 [shape = 'u8[32768]{0}', space=vmem, size = 0x8000, scoped, tag = 'input window, operand 0, single buffered']
    #allocation4 [shape = 's32[1]{0}', space=sflag, size = 0x4, scoped, tag = 'scoped memory for tpu_custom_call.1']
    #allocation5 [shape = 's32[1]{0}', space=sflag, size = 0x4, scoped, tag = 'scoped memory for tpu_custom_call.1']
    #allocation6 [shape = 'u8[32768]{0}', space=vmem, size = 0x8000, scoped, tag = 'input window, operand 1, single buffered']
    #allocation7 [shape = 's32[1]{0}', space=sflag, size = 0x4, scoped, tag = 'scoped memory for tpu_custom_call.1']
    #allocation8 [shape = 'u8[4096]{0}', space=vmem, size = 0x1000, scoped, tag = 'input window, operand 2, single buffered']
    #allocation9 [shape = 'u8[32768]{0}', space=vmem, size = 0x8000, scoped, tag = 'output window, operand 0, single buffered']
    #allocation10 [shape = 'u8[32768]{0}', space=vmem, size = 0x8000, scoped, tag = 'output window, operand 1, single buffered']
    #allocation11 [shape = 's32[1]{0}', space=sflag, size = 0x4, scoped, tag = 'scoped memory for tpu_custom_call.1']
    %11 = vsyncpa [#allocation4], 0
    %12 = vsyncpa [#allocation7], 0
    %13 = vsyncpa [#allocation5], 0
    %14 = vsyncpa [#allocation11], 0
    // Predicated region
    $region2: #{tpu_custom_call.1} parent=1 // pred_check
      _
    $region3: #{tpu_custom_call.1} parent=1 // pred_check_branch
      %16 = sbr.rel (0) target = $region5
    $region4: #{tpu_custom_call.1} parent=1 // pred_region
      %s18 = ssub.s32 1024, 1024
      %19 = vsyncadd [#allocation4], %s18
      %s21 = sshll.u32 [#allocation3], 4
      %s22 = int_to_ptr.vmem [resolvable:$true] %s21
      %24 = dma.hbm_to_vmem [thread:$0]  %s0, 1024, %s22, [#allocation4]
    $region5: #{tpu_custom_call.1} parent=1 // pred_fallthru
      _
    // Predicated region
    $region6: #{tpu_custom_call.1} parent=1 // pred_check
      _
    $region7: #{tpu_custom_call.1} parent=1 // pred_check_branch
      %26 = sbr.rel (0) target = $region9
    $region8: #{tpu_custom_call.1} parent=1 // pred_region
      %s28 = ssub.s32 1024, 1024
      %29 = vsyncadd [#allocation7], %s28
      %s31 = sshll.u32 [#allocation6], 4
      %s32 = int_to_ptr.vmem [resolvable:$true] %s31
      %34 = dma.hbm_to_vmem [thread:$0]  %s1, 1024, %s32, [#allocation7]
    $region9: #{tpu_custom_call.1} parent=1 // pred_fallthru
      _
    // Predicated region
    $region10: #{tpu_custom_call.1} parent=1 // pred_check
      _
    $region11: #{tpu_custom_call.1} parent=1 // pred_check_branch
      %36 = sbr.rel (0) target = $region13
    $region12: #{tpu_custom_call.1} parent=1 // pred_region
      %s38 = ssub.s32 128, 128
      %39 = vsyncadd [#allocation7], %s38
      %s41 = sshll.u32 [#allocation8], 4
      %s42 = int_to_ptr.vmem [resolvable:$true] %s41
      %44 = dma.hbm_to_vmem [thread:$0]  %s2, 128, %s42, [#allocation7]
    $region13: #{tpu_custom_call.1} parent=1 // pred_fallthru
      _
    // Predicated region
    $region14: #{tpu_custom_call.1} parent=1 // pred_check
      _
    $region15: #{tpu_custom_call.1} parent=1 // pred_check_branch
      %46 = sbr.rel (0) target = $region17
    $region16: #{tpu_custom_call.1} parent=1 // pred_region
      _
    $region17: #{tpu_custom_call.1} parent=1 // pred_fallthru
      _
    // Predicated region
    $region18: #{tpu_custom_call.1} parent=1 // pred_check
      _
    $region19: #{tpu_custom_call.1} parent=1 // pred_check_branch
      %48 = sbr.rel (0) target = $region21
    $region20: #{tpu_custom_call.1} parent=1 // pred_region
      %49 = dma.done [#allocation4], 1024
    $region21: #{tpu_custom_call.1} parent=1 // pred_fallthru
      _
    // Predicated region
    $region22: #{tpu_custom_call.1} parent=1 // pred_check
      _
    $region23: #{tpu_custom_call.1} parent=1 // pred_check_branch
      %51 = sbr.rel (0) target = $region25
    $region24: #{tpu_custom_call.1} parent=1 // pred_region
      %52 = dma.done [#allocation7], 1024
    $region25: #{tpu_custom_call.1} parent=1 // pred_fallthru
      _
    // Predicated region
    $region26: #{tpu_custom_call.1} parent=1 // pred_check
      _
    $region27: #{tpu_custom_call.1} parent=1 // pred_check_branch
      %54 = sbr.rel (0) target = $region29
    $region28: #{tpu_custom_call.1} parent=1 // pred_region
      %55 = dma.done [#allocation7], 128
    $region29: #{tpu_custom_call.1} parent=1 // pred_fallthru
      _
    %p56 = scmp.eq.s32.totalorder 0, 0
    // Predicated region
    $region30: #{tpu_custom_call.1} parent=1 // pred_check
      %p57 = pneg %p56
    $region31: #{tpu_custom_call.1} parent=1 // pred_check_branch
      %59 = sbr.rel (%p57) target = $region33
    $region32: #{tpu_custom_call.1} parent=1 // pred_region
      %vm60 = vcmask 64512
      %61 = vst.msk [vmem:[#allocation2] sm:$0xff] %vm60, 0.0
    $region33: #{tpu_custom_call.1} parent=1 // pred_fallthru
      _
    %v62 = vld [vmem:[#allocation2] sm:$0xff]
    %v63 = vld [vmem:[#allocation6] sm:$0xff]
    %v64 = vld [vmem:[#allocation6 + $0x8] sm:$0xff]
    %v65 = vld [vmem:[#allocation6 + $0x10] sm:$0xff]
    %v66 = vld [vmem:[#allocation6 + $0x18] sm:$0xff]
    %v67 = vld [vmem:[#allocation6 + $0x20] sm:$0xff]
    %v68 = vld [vmem:[#allocation6 + $0x28] sm:$0xff]
    %v69 = vld [vmem:[#allocation6 + $0x30] sm:$0xff]
    %v70 = vld [vmem:[#allocation6 + $0x38] sm:$0xff]
    %v71 = vld [vmem:[#allocation3] sm:$0xff]
    %v72 = vld [vmem:[#allocation3 + $0x8] sm:$0xff]
    %v73 = vld [vmem:[#allocation3 + $0x10] sm:$0xff]
    %v74 = vld [vmem:[#allocation3 + $0x18] sm:$0xff]
    %v75 = vld [vmem:[#allocation3 + $0x20] sm:$0xff]
    %v76 = vld [vmem:[#allocation3 + $0x28] sm:$0xff]
    %v77 = vld [vmem:[#allocation3 + $0x30] sm:$0xff]
    %v78 = vld [vmem:[#allocation3 + $0x38] sm:$0xff]
    %79 = vmatprep.subr.mxu0 %v72
    %80 = vmatpush1.xpose.msra.mxu0 %v71
    %81 = vmatprep.subr.mxu0 0.0
    %82 = vmatpush1.xpose.msra.mxu0 0.0
    %83 = vmatprep.subr.mxu0 0.0
    %84 = vmatpush1.xpose.msra.mxu0 0.0
    %85 = vmatprep.subr.mxu0 0.0
    %86 = vmatpush1.xpose.msra.mxu0 0.0
    %87 = vmatprep.subr.mxu0 0.0
    %88 = vmatpush1.xpose.msra.mxu0 0.0
    %89 = vmatprep.subr.mxu0 0.0
    %90 = vmatpush1.xpose.msra.mxu0 0.0
    %91 = vmatprep.subr.mxu0 0.0
    %92 = vmatpush1.xpose.msra.mxu0 0.0
    %93 = vmatprep.subr.mxu0 0.0
    %94 = vmatpush1.xpose.msra.mxu0 0.0
    %95 = vmatprep.subr.mxu0 0.0
    %96 = vmatpush1.xpose.msra.mxu0 0.0
    %97 = vmatprep.subr.mxu0 0.0
    %98 = vmatpush1.xpose.msra.mxu0 0.0
    %99 = vmatprep.subr.mxu0 0.0
    %100 = vmatpush1.xpose.msra.mxu0 0.0
    %101 = vmatprep.subr.mxu0 0.0
    %102 = vmatpush1.xpose.msra.mxu0 0.0
    %103 = vmatprep.subr.mxu0 0.0
    %104 = vmatpush1.xpose.msra.mxu0 0.0
    %105 = vmatprep.subr.mxu0 0.0
    %106 = vmatpush1.xpose.msra.mxu0 0.0
    %107 = vmatprep.subr.mxu0 0.0
    %108 = vmatpush1.xpose.msra.mxu0 0.0
    %109 = vmatprep.subr.mxu0 0.0
    %110 = vmatpush1.xpose.msra.mxu0 0.0
    %111 = vmatprep.subr.mxu0 0.0
    %112 = vmatpush1.xpose.msra.mxu0 0.0
    %113 = vmatprep.subr.mxu0 0.0
    %114 = vmatpush1.xpose.msra.mxu0 0.0
    %115 = vmatprep.subr.mxu0 0.0
    %116 = vmatpush1.xpose.msra.mxu0 0.0
    %117 = vmatprep.subr.mxu0 0.0
    %118 = vmatpush1.xpose.msra.mxu0 0.0
    %119 = vmatprep.subr.mxu0 0.0
    %120 = vmatpush1.xpose.msra.mxu0 0.0
    %121 = vmatprep.subr.mxu0 0.0
    %122 = vmatpush1.xpose.msra.mxu0 0.0
    %123 = vmatprep.subr.mxu0 0.0
    %124 = vmatpush1.xpose.msra.mxu0 0.0
    %125 = vmatprep.subr.mxu0 0.0
    %126 = vmatpush1.xpose.msra.mxu0 0.0
    %127 = vmatprep.subr.mxu0 0.0
    %128 = vmatpush1.xpose.msra.mxu0 0.0
    %129 = vmatprep.subr.mxu0 0.0
    %130 = vmatpush1.xpose.msra.mxu0 0.0
    %131 = vmatprep.subr.mxu0 0.0
    %132 = vmatpush1.xpose.msra.mxu0 0.0
    %133 = vmatprep.subr.mxu0 0.0
    %134 = vmatpush1.xpose.msra.mxu0 0.0
    %135 = vmatprep.subr.mxu0 0.0
    %136 = vmatpush1.xpose.msra.mxu0 0.0
    %137 = vmatprep.subr.mxu0 0.0
    %138 = vmatpush1.xpose.msra.mxu0 0.0
    %139 = vmatprep.subr.mxu0 0.0
    %140 = vmatpush1.xpose.msra.mxu0 0.0
    %141 = vmatprep.subr.mxu0 0.0
    %142 = vmatpush1.xpose.msra.mxu0 0.0
    %143 = vmatprep.mubr.f32.mxu0 %v64
    %144 = vmatmul.mubr.f32.gmra.mrb[0].mxu0 %v63
    %v145 = vpop.f32.mrb[0].mxu0
    %v146 = vadd.f32 0.0, %v145
    %v147 = vpop.f32.mrb[0].mxu0
    %148 = vdwg.mxu0
    %149 = vmatprep.subr.mxu0 %v74
    %150 = vmatpush1.xpose.msra.mxu0 %v73
    %151 = vmatprep.subr.mxu0 0.0
    %152 = vmatpush1.xpose.msra.mxu0 0.0
    %153 = vmatprep.subr.mxu0 0.0
    %154 = vmatpush1.xpose.msra.mxu0 0.0
    %155 = vmatprep.subr.mxu0 0.0
    %156 = vmatpush1.xpose.msra.mxu0 0.0
    %157 = vmatprep.subr.mxu0 0.0
    %158 = vmatpush1.xpose.msra.mxu0 0.0
    %159 = vmatprep.subr.mxu0 0.0
    %160 = vmatpush1.xpose.msra.mxu0 0.0
    %161 = vmatprep.subr.mxu0 0.0
    %162 = vmatpush1.xpose.msra.mxu0 0.0
    %163 = vmatprep.subr.mxu0 0.0
    %164 = vmatpush1.xpose.msra.mxu0 0.0
    %165 = vmatprep.subr.mxu0 0.0
    %166 = vmatpush1.xpose.msra.mxu0 0.0
    %167 = vmatprep.subr.mxu0 0.0
    %168 = vmatpush1.xpose.msra.mxu0 0.0
    %169 = vmatprep.subr.mxu0 0.0
    %170 = vmatpush1.xpose.msra.mxu0 0.0
    %171 = vmatprep.subr.mxu0 0.0
    %172 = vmatpush1.xpose.msra.mxu0 0.0
    %173 = vmatprep.subr.mxu0 0.0
    %174 = vmatpush1.xpose.msra.mxu0 0.0
    %175 = vmatprep.subr.mxu0 0.0
    %176 = vmatpush1.xpose.msra.mxu0 0.0
    %177 = vmatprep.subr.mxu0 0.0
    %178 = vmatpush1.xpose.msra.mxu0 0.0
    %179 = vmatprep.subr.mxu0 0.0
    %180 = vmatpush1.xpose.msra.mxu0 0.0
    %181 = vmatprep.subr.mxu0 0.0
    %182 = vmatpush1.xpose.msra.mxu0 0.0
    %183 = vmatprep.subr.mxu0 0.0
    %184 = vmatpush1.xpose.msra.mxu0 0.0
    %185 = vmatprep.subr.mxu0 0.0
    %186 = vmatpush1.xpose.msra.mxu0 0.0
    %187 = vmatprep.subr.mxu0 0.0
    %188 = vmatpush1.xpose.msra.mxu0 0.0
    %189 = vmatprep.subr.mxu0 0.0
    %190 = vmatpush1.xpose.msra.mxu0 0.0
    %191 = vmatprep.subr.mxu0 0.0
    %192 = vmatpush1.xpose.msra.mxu0 0.0
    %193 = vmatprep.subr.mxu0 0.0
    %194 = vmatpush1.xpose.msra.mxu0 0.0
    %195 = vmatprep.subr.mxu0 0.0
    %196 = vmatpush1.xpose.msra.mxu0 0.0
    %197 = vmatprep.subr.mxu0 0.0
    %198 = vmatpush1.xpose.msra.mxu0 0.0
    %199 = vmatprep.subr.mxu0 0.0
    %200 = vmatpush1.xpose.msra.mxu0 0.0
    %201 = vmatprep.subr.mxu0 0.0
    %202 = vmatpush1.xpose.msra.mxu0 0.0
    %203 = vmatprep.subr.mxu0 0.0
    %204 = vmatpush1.xpose.msra.mxu0 0.0
    %205 = vmatprep.subr.mxu0 0.0
    %206 = vmatpush1.xpose.msra.mxu0 0.0
    %207 = vmatprep.subr.mxu0 0.0
    %208 = vmatpush1.xpose.msra.mxu0 0.0
    %209 = vmatprep.subr.mxu0 0.0
    %210 = vmatpush1.xpose.msra.mxu0 0.0
    %211 = vmatprep.subr.mxu0 0.0
    %212 = vmatpush1.xpose.msra.mxu0 0.0
    %213 = vmatprep.mubr.f32.mxu0 %v66
    %214 = vmatmul.mubr.f32.gmra.mrb[0].mxu0 %v65
    %v215 = vpop.f32.mrb[0].mxu0
    %v216 = vadd.f32 %v146, %v215
    %v217 = vpop.f32.mrb[0].mxu0
    %218 = vdwg.mxu0
    %219 = vmatprep.subr.mxu0 %v76
    %220 = vmatpush1.xpose.msra.mxu0 %v75
    %221 = vmatprep.subr.mxu0 0.0
    %222 = vmatpush1.xpose.msra.mxu0 0.0
    %223 = vmatprep.subr.mxu0 0.0
    %224 = vmatpush1.xpose.msra.mxu0 0.0
    %225 = vmatprep.subr.mxu0 0.0
    %226 = vmatpush1.xpose.msra.mxu0 0.0
    %227 = vmatprep.subr.mxu0 0.0
    %228 = vmatpush1.xpose.msra.mxu0 0.0
    %229 = vmatprep.subr.mxu0 0.0
    %230 = vmatpush1.xpose.msra.mxu0 0.0
    %231 = vmatprep.subr.mxu0 0.0
    %232 = vmatpush1.xpose.msra.mxu0 0.0
    %233 = vmatprep.subr.mxu0 0.0
    %234 = vmatpush1.xpose.msra.mxu0 0.0
    %235 = vmatprep.subr.mxu0 0.0
    %236 = vmatpush1.xpose.msra.mxu0 0.0
    %237 = vmatprep.subr.mxu0 0.0
    %238 = vmatpush1.xpose.msra.mxu0 0.0
    %239 = vmatprep.subr.mxu0 0.0
    %240 = vmatpush1.xpose.msra.mxu0 0.0
    %241 = vmatprep.subr.mxu0 0.0
    %242 = vmatpush1.xpose.msra.mxu0 0.0
    %243 = vmatprep.subr.mxu0 0.0
    %244 = vmatpush1.xpose.msra.mxu0 0.0
    %245 = vmatprep.subr.mxu0 0.0
    %246 = vmatpush1.xpose.msra.mxu0 0.0
    %247 = vmatprep.subr.mxu0 0.0
    %248 = vmatpush1.xpose.msra.mxu0 0.0
    %249 = vmatprep.subr.mxu0 0.0
    %250 = vmatpush1.xpose.msra.mxu0 0.0
    %251 = vmatprep.subr.mxu0 0.0
    %252 = vmatpush1.xpose.msra.mxu0 0.0
    %253 = vmatprep.subr.mxu0 0.0
    %254 = vmatpush1.xpose.msra.mxu0 0.0
    %255 = vmatprep.subr.mxu0 0.0
    %256 = vmatpush1.xpose.msra.mxu0 0.0
    %257 = vmatprep.subr.mxu0 0.0
    %258 = vmatpush1.xpose.msra.mxu0 0.0
    %259 = vmatprep.subr.mxu0 0.0
    %260 = vmatpush1.xpose.msra.mxu0 0.0
    %261 = vmatprep.subr.mxu0 0.0
    %262 = vmatpush1.xpose.msra.mxu0 0.0
    %263 = vmatprep.subr.mxu0 0.0
    %264 = vmatpush1.xpose.msra.mxu0 0.0
    %265 = vmatprep.subr.mxu0 0.0
    %266 = vmatpush1.xpose.msra.mxu0 0.0
    %267 = vmatprep.subr.mxu0 0.0
    %268 = vmatpush1.xpose.msra.mxu0 0.0
    %269 = vmatprep.subr.mxu0 0.0
    %270 = vmatpush1.xpose.msra.mxu0 0.0
    %271 = vmatprep.subr.mxu0 0.0
    %272 = vmatpush1.xpose.msra.mxu0 0.0
    %273 = vmatprep.subr.mxu0 0.0
    %274 = vmatpush1.xpose.msra.mxu0 0.0
    %275 = vmatprep.subr.mxu0 0.0
    %276 = vmatpush1.xpose.msra.mxu0 0.0
    %277 = vmatprep.subr.mxu0 0.0
    %278 = vmatpush1.xpose.msra.mxu0 0.0
    %279 = vmatprep.subr.mxu0 0.0
    %280 = vmatpush1.xpose.msra.mxu0 0.0
    %281 = vmatprep.subr.mxu0 0.0
    %282 = vmatpush1.xpose.msra.mxu0 0.0
    %283 = vmatprep.mubr.f32.mxu0 %v68
    %284 = vmatmul.mubr.f32.gmra.mrb[0].mxu0 %v67
    %v285 = vpop.f32.mrb[0].mxu0
    %v286 = vadd.f32 %v216, %v285
    %v287 = vpop.f32.mrb[0].mxu0
    %288 = vdwg.mxu0
    %289 = vmatprep.subr.mxu0 %v78
    %290 = vmatpush1.xpose.msra.mxu0 %v77
    %291 = vmatprep.subr.mxu0 0.0
    %292 = vmatpush1.xpose.msra.mxu0 0.0
    %293 = vmatprep.subr.mxu0 0.0
    %294 = vmatpush1.xpose.msra.mxu0 0.0
    %295 = vmatprep.subr.mxu0 0.0
    %296 = vmatpush1.xpose.msra.mxu0 0.0
    %297 = vmatprep.subr.mxu0 0.0
    %298 = vmatpush1.xpose.msra.mxu0 0.0
    %299 = vmatprep.subr.mxu0 0.0
    %300 = vmatpush1.xpose.msra.mxu0 0.0
    %301 = vmatprep.subr.mxu0 0.0
    %302 = vmatpush1.xpose.msra.mxu0 0.0
    %303 = vmatprep.subr.mxu0 0.0
    %304 = vmatpush1.xpose.msra.mxu0 0.0
    %305 = vmatprep.subr.mxu0 0.0
    %306 = vmatpush1.xpose.msra.mxu0 0.0
    %307 = vmatprep.subr.mxu0 0.0
    %308 = vmatpush1.xpose.msra.mxu0 0.0
    %309 = vmatprep.subr.mxu0 0.0
    %310 = vmatpush1.xpose.msra.mxu0 0.0
    %311 = vmatprep.subr.mxu0 0.0
    %312 = vmatpush1.xpose.msra.mxu0 0.0
    %313 = vmatprep.subr.mxu0 0.0
    %314 = vmatpush1.xpose.msra.mxu0 0.0
    %315 = vmatprep.subr.mxu0 0.0
    %316 = vmatpush1.xpose.msra.mxu0 0.0
    %317 = vmatprep.subr.mxu0 0.0
    %318 = vmatpush1.xpose.msra.mxu0 0.0
    %319 = vmatprep.subr.mxu0 0.0
    %320 = vmatpush1.xpose.msra.mxu0 0.0
    %321 = vmatprep.subr.mxu0 0.0
    %322 = vmatpush1.xpose.msra.mxu0 0.0
    %323 = vmatprep.subr.mxu0 0.0
    %324 = vmatpush1.xpose.msra.mxu0 0.0
    %325 = vmatprep.subr.mxu0 0.0
    %326 = vmatpush1.xpose.msra.mxu0 0.0
    %327 = vmatprep.subr.mxu0 0.0
    %328 = vmatpush1.xpose.msra.mxu0 0.0
    %329 = vmatprep.subr.mxu0 0.0
    %330 = vmatpush1.xpose.msra.mxu0 0.0
    %331 = vmatprep.subr.mxu0 0.0
    %332 = vmatpush1.xpose.msra.mxu0 0.0
    %333 = vmatprep.subr.mxu0 0.0
    %334 = vmatpush1.xpose.msra.mxu0 0.0
    %335 = vmatprep.subr.mxu0 0.0
    %336 = vmatpush1.xpose.msra.mxu0 0.0
    %337 = vmatprep.subr.mxu0 0.0
    %338 = vmatpush1.xpose.msra.mxu0 0.0
    %339 = vmatprep.subr.mxu0 0.0
    %340 = vmatpush1.xpose.msra.mxu0 0.0
    %341 = vmatprep.subr.mxu0 0.0
    %342 = vmatpush1.xpose.msra.mxu0 0.0
    %343 = vmatprep.subr.mxu0 0.0
    %344 = vmatpush1.xpose.msra.mxu0 0.0
    %345 = vmatprep.subr.mxu0 0.0
    %346 = vmatpush1.xpose.msra.mxu0 0.0
    %347 = vmatprep.subr.mxu0 0.0
    %348 = vmatpush1.xpose.msra.mxu0 0.0
    %349 = vmatprep.subr.mxu0 0.0
    %350 = vmatpush1.xpose.msra.mxu0 0.0
    %351 = vmatprep.subr.mxu0 0.0
    %352 = vmatpush1.xpose.msra.mxu0 0.0
    %353 = vmatprep.mubr.f32.mxu0 %v70
    %354 = vmatmul.mubr.f32.gmra.mrb[0].mxu0 %v69
    %v355 = vpop.f32.mrb[0].mxu0
    %v356 = vadd.f32 %v286, %v355
    %v357 = vpop.f32.mrb[0].mxu0
    %358 = vdwg.mxu0
    %v359 = vadd.f32 %v62, %v356
    %vm360 = vcmask 64512
    %361 = vst.msk [vmem:[#allocation2] sm:$0xff] %vm360, %v359
    // Predicated region
    $region34: #{tpu_custom_call.1} parent=1 // pred_check
      %p362 = pneg %p56
    $region35: #{tpu_custom_call.1} parent=1 // pred_check_branch
      %364 = sbr.rel (%p362) target = $region37
    $region36: #{tpu_custom_call.1} parent=1 // pred_region
      %v365 = vld [vmem:[#allocation2] sm:$0xff]
      %v366 = vld [vmem:[#allocation8] sm:$0xff]
      %v367 = vsub.f32 %v365, %v366
      %v368 = vld [vmem:[%s3] sm:$0xff]
      %v370 = vsel %vm360, %v368, 0
      %v373 = vsel %vm360, %v367, 0
      %375 = vmatprep.subr.mxu0 0.0
      %376 = vmatpush1.xpose.msra.mxu0 %v373
      %377 = vmatprep.subr.mxu0 0.0
      %378 = vmatpush1.xpose.msra.mxu0 0.0
      %379 = vmatprep.subr.mxu0 0.0
      %380 = vmatpush1.xpose.msra.mxu0 0.0
      %381 = vmatprep.subr.mxu0 0.0
      %382 = vmatpush1.xpose.msra.mxu0 0.0
      %383 = vmatprep.subr.mxu0 0.0
      %384 = vmatpush1.xpose.msra.mxu0 0.0
      %385 = vmatprep.subr.mxu0 0.0
      %386 = vmatpush1.xpose.msra.mxu0 0.0
      %387 = vmatprep.subr.mxu0 0.0
      %388 = vmatpush1.xpose.msra.mxu0 0.0
      %389 = vmatprep.subr.mxu0 0.0
      %390 = vmatpush1.xpose.msra.mxu0 0.0
      %391 = vmatprep.subr.mxu0 0.0
      %392 = vmatpush1.xpose.msra.mxu0 0.0
      %393 = vmatprep.subr.mxu0 0.0
      %394 = vmatpush1.xpose.msra.mxu0 0.0
      %395 = vmatprep.subr.mxu0 0.0
      %396 = vmatpush1.xpose.msra.mxu0 0.0
      %397 = vmatprep.subr.mxu0 0.0
      %398 = vmatpush1.xpose.msra.mxu0 0.0
      %399 = vmatprep.subr.mxu0 0.0
      %400 = vmatpush1.xpose.msra.mxu0 0.0
      %401 = vmatprep.subr.mxu0 0.0
      %402 = vmatpush1.xpose.msra.mxu0 0.0
      %403 = vmatprep.subr.mxu0 0.0
      %404 = vmatpush1.xpose.msra.mxu0 0.0
      %405 = vmatprep.subr.mxu0 0.0
      %406 = vmatpush1.xpose.msra.mxu0 0.0
      %407 = vmatprep.subr.mxu0 0.0
      %408 = vmatpush1.xpose.msra.mxu0 0.0
      %409 = vmatprep.subr.mxu0 0.0
      %410 = vmatpush1.xpose.msra.mxu0 0.0
      %411 = vmatprep.subr.mxu0 0.0
      %412 = vmatpush1.xpose.msra.mxu0 0.0
      %413 = vmatprep.subr.mxu0 0.0
      %414 = vmatpush1.xpose.msra.mxu0 0.0
      %415 = vmatprep.subr.mxu0 0.0
      %416 = vmatpush1.xpose.msra.mxu0 0.0
      %417 = vmatprep.subr.mxu0 0.0
      %418 = vmatpush1.xpose.msra.mxu0 0.0
      %419 = vmatprep.subr.mxu0 0.0
      %420 = vmatpush1.xpose.msra.mxu0 0.0
      %421 = vmatprep.subr.mxu0 0.0
      %422 = vmatpush1.xpose.msra.mxu0 0.0
      %423 = vmatprep.subr.mxu0 0.0
      %424 = vmatpush1.xpose.msra.mxu0 0.0
      %425 = vmatprep.subr.mxu0 0.0
      %426 = vmatpush1.xpose.msra.mxu0 0.0
      %427 = vmatprep.subr.mxu0 0.0
      %428 = vmatpush1.xpose.msra.mxu0 0.0
      %429 = vmatprep.subr.mxu0 0.0
      %430 = vmatpush1.xpose.msra.mxu0 0.0
      %431 = vmatprep.subr.mxu0 0.0
      %432 = vmatpush1.xpose.msra.mxu0 0.0
      %433 = vmatprep.subr.mxu0 0.0
      %434 = vmatpush1.xpose.msra.mxu0 0.0
      %435 = vmatprep.subr.mxu0 0.0
      %436 = vmatpush1.xpose.msra.mxu0 0.0
      %437 = vmatprep.subr.mxu0 0.0
      %438 = vmatpush1.xpose.msra.mxu0 0.0
      %439 = vmatprep.mubr.f32.mxu0 0.0
      %440 = vmatmul.mubr.f32.gmra.mrb[0].mxu0 %v370
      %v441 = vpop.f32.mrb[0].mxu0
      %v442 = vadd.f32 0.0, %v441
      %v443 = vpop.f32.mrb[0].mxu0
      %444 = vdwg.mxu0
      %445 = vst [vmem:[#allocation10] sm:$0xff] 0.0
      %446 = vst [vmem:[#allocation10 + $0x8] sm:$0xff] 0.0
      %447 = vst [vmem:[#allocation10 + $0x10] sm:$0xff] 0.0
      %448 = vst [vmem:[#allocation10 + $0x18] sm:$0xff] 0.0
      %449 = vst [vmem:[#allocation10 + $0x20] sm:$0xff] 0.0
      %450 = vst [vmem:[#allocation10 + $0x28] sm:$0xff] 0.0
      %451 = vst [vmem:[#allocation10 + $0x30] sm:$0xff] 0.0
      %452 = vst [vmem:[#allocation10 + $0x38] sm:$0xff] 0.0
      %453 = vst.msk [vmem:[#allocation10] sm:$0xff] %vm360, %v442
      %v454 = vld [vmem:[%s3] sm:$0xff]
      %v455 = vcombine.high %v367, %v367
      %v457 = vunpack.c.l.s4 1966171168
      %v458 = vunpack.c.0.s8 %v457
      %v459 = vlaneseq
      %v460 = vshrl.u32 %v459, 7
      %v461 = vsub.s32 %v458, %v460
      %v462 = vrot.slane %v367, %v461
      %v464 = vunpack.c.l.s4 1966171168
      %v465 = vunpack.c.0.s8 %v464
      %v466 = vlaneseq
      %v467 = vshrl.u32 %v466, 7
      %v468 = vsub.s32 %v465, %v467
      %v469 = vrot.slane %v455, %v468
      %v470 = vcombine.high %v462, %v462
      %v471 = vcombine.high %v469, %v469
      %v473 = vunpack.c.l.s4 1966171168
      %v474 = vunpack.c.0.s8 %v473
      %v475 = vlaneseq
      %v476 = vshrl.u32 %v475, 7
      %v477 = vsub.s32 %v474, %v476
      %v478 = vrot.slane %v462, %v477
      %v480 = vunpack.c.l.s4 1966171168
      %v481 = vunpack.c.0.s8 %v480
      %v482 = vlaneseq
      %v483 = vshrl.u32 %v482, 7
      %v484 = vsub.s32 %v481, %v483
      %v485 = vrot.slane %v469, %v484
      %v487 = vunpack.c.l.s4 1966171168
      %v488 = vunpack.c.0.s8 %v487
      %v489 = vlaneseq
      %v490 = vshrl.u32 %v489, 7
      %v491 = vsub.s32 %v488, %v490
      %v492 = vrot.slane %v470, %v491
      %v494 = vunpack.c.l.s4 1966171168
      %v495 = vunpack.c.0.s8 %v494
      %v496 = vlaneseq
      %v497 = vshrl.u32 %v496, 7
      %v498 = vsub.s32 %v495, %v497
      %v499 = vrot.slane %v471, %v498
      %v500 = vcombine.high %v478, %v478
      %v501 = vcombine.high %v485, %v485
      %v502 = vcombine.high %v492, %v492
      %v503 = vcombine.high %v499, %v499
      %v504 = vlaneseq
      %v505 = vshrl.u32 %v504, 7
      %v506 = vsub.s32 0, %v505
      %v507 = vrot.slane %v478, %v506
      %v508 = vlaneseq
      %v509 = vshrl.u32 %v508, 7
      %v510 = vsub.s32 0, %v509
      %v511 = vrot.slane %v492, %v510
      %v512 = vlaneseq
      %v513 = vshrl.u32 %v512, 7
      %v514 = vsub.s32 0, %v513
      %v515 = vrot.slane %v500, %v514
      %v516 = vlaneseq
      %v517 = vshrl.u32 %v516, 7
      %v518 = vsub.s32 0, %v517
      %v519 = vrot.slane %v502, %v518
      %v520 = vlaneseq
      %v521 = vshrl.u32 %v520, 7
      %v522 = vsub.s32 0, %v521
      %v523 = vrot.slane %v485, %v522
      %v524 = vlaneseq
      %v525 = vshrl.u32 %v524, 7
      %v526 = vsub.s32 0, %v525
      %v527 = vrot.slane %v499, %v526
      %v528 = vlaneseq
      %v529 = vshrl.u32 %v528, 7
      %v530 = vsub.s32 0, %v529
      %v531 = vrot.slane %v501, %v530
      %v532 = vlaneseq
      %v533 = vshrl.u32 %v532, 7
      %v534 = vsub.s32 0, %v533
      %v535 = vrot.slane %v503, %v534
      %v544 = vmul.f32 %v454, %v507
      %v545 = vmul.f32 %v454, %v511
      %v546 = vmul.f32 %v454, %v515
      %v547 = vmul.f32 %v454, %v519
      %v548 = vmul.f32 %v454, %v523
      %v549 = vmul.f32 %v454, %v527
      %v550 = vmul.f32 %v454, %v531
      %v551 = vmul.f32 %v454, %v535
      %552 = vst.msk [vmem:[#allocation9] sm:$0xff] %vm360, %v544
      %553 = vst.msk [vmem:[#allocation9 + $0x8] sm:$0xff] %vm360, %v545
      %554 = vst.msk [vmem:[#allocation9 + $0x10] sm:$0xff] %vm360, %v546
      %555 = vst.msk [vmem:[#allocation9 + $0x18] sm:$0xff] %vm360, %v547
      %556 = vst.msk [vmem:[#allocation9 + $0x20] sm:$0xff] %vm360, %v548
      %557 = vst.msk [vmem:[#allocation9 + $0x28] sm:$0xff] %vm360, %v549
      %558 = vst.msk [vmem:[#allocation9 + $0x30] sm:$0xff] %vm360, %v550
      %559 = vst.msk [vmem:[#allocation9 + $0x38] sm:$0xff] %vm360, %v551
    $region37: #{tpu_custom_call.1} parent=1 // pred_fallthru
      _
    // Predicated region
    $region38: #{tpu_custom_call.1} parent=1 // pred_check
      _
    $region39: #{tpu_custom_call.1} parent=1 // pred_check_branch
      %561 = sbr.rel (0) target = $region41
    $region40: #{tpu_custom_call.1} parent=1 // pred_region
      %s563 = ssub.s32 1024, 1024
      %564 = vsyncadd [#allocation5], %s563
      %s565 = sshll.u32 [#allocation9], 4
      %s566 = int_to_ptr.vmem [resolvable:$true] %s565
      %571 = dma.vmem_to_hbm [thread:$0]  %s566, 1024, %s4, [#allocation5], 128, 128, 8
    $region41: #{tpu_custom_call.1} parent=1 // pred_fallthru
      _
    // Predicated region
    $region42: #{tpu_custom_call.1} parent=1 // pred_check
      _
    $region43: #{tpu_custom_call.1} parent=1 // pred_check_branch
      %573 = sbr.rel (0) target = $region45
    $region44: #{tpu_custom_call.1} parent=1 // pred_region
      %s575 = ssub.s32 1024, 1024
      %576 = vsyncadd [#allocation11], %s575
      %s578 = sshll.u32 [#allocation10], 4
      %s579 = int_to_ptr.vmem [resolvable:$true] %s578
      %581 = dma.vmem_to_hbm [thread:$0]  %s579, 1024, %s5, [#allocation11]
    $region45: #{tpu_custom_call.1} parent=1 // pred_fallthru
      _
    // Predicated region
    $region46: #{tpu_custom_call.1} parent=1 // pred_check
      _
    $region47: #{tpu_custom_call.1} parent=1 // pred_check_branch
      %583 = sbr.rel (0) target = $region49
    $region48: #{tpu_custom_call.1} parent=1 // pred_region
      %584 = dma.done [#allocation5], 1024
    $region49: #{tpu_custom_call.1} parent=1 // pred_fallthru
      _
    // Predicated region
    $region50: #{tpu_custom_call.1} parent=1 // pred_check
      _
    $region51: #{tpu_custom_call.1} parent=1 // pred_check_branch
      %586 = sbr.rel (0) target = $region53
    $region52: #{tpu_custom_call.1} parent=1 // pred_region
      %587 = dma.done [#allocation11], 1024
    $region53: #{tpu_custom_call.1} parent=1 // pred_fallthru
      _
    %588 = vsyncpa [#allocation4], 1
    %589 = vsyncpa [#allocation7], 1
    %590 = vsyncpa [#allocation5], 1
    %591 = vsyncpa [#allocation11], 1

</llo_original>
